<compile_context>
chip_gen: v6e
topology: v6e:2x2x1
jax: 0.10.0
libtpu: 0.0.40
codegen_flags: <defaults>
</compile_context>

<pallas_src>
import jax
import jax.numpy as jnp
from jax.experimental import pallas as pl
from jax.experimental.pallas import tpu as pltpu

NEG_INF = -1e9          # plain Python float: safe to use inside the kernel
LANE = 128
SUBLANE_PACK = 16       # bf16 packed sublane tile -> keep S/T multiples of 16


def _round_up(x, m):
    return ((x + m - 1) // m) * m


def _pad_axis(x, target, axis, value=0):
    pad = target - x.shape[axis]
    if pad <= 0:
        return x
    widths = [(0, 0)] * x.ndim
    widths[axis] = (0, pad)
    return jnp.pad(x, widths, constant_values=value)


def _vmem_capacity_bytes():
    try:
        return int(pltpu.get_tpu_info().vmem_capacity_bytes)
    except Exception:
        return 64 * 1024 * 1024   # conservative (v7x per-TC)


def _vmem_estimate(bblk, Sp, Tp, H, Vs_pad, Vpad, logits_bytes):
    """Rough per-grid-step VMEM footprint model for a given batch block."""
    # streamed input blocks, x2 double buffering
    stream = 2 * (bblk * Sp * H * 2 + bblk * Tp * H * 2 + bblk * Sp * 4 + bblk * Tp * 8)
    # output logits block, x2 double buffering (+ tiny stats)
    out = 2 * (bblk * Tp * Vpad * logits_bytes) + 64
    # resident weights (default pipeline still double-buffers constant blocks)
    weights = 2 * ((3 * H * H + H * Vs_pad) * 2 + (2 * H + Vs_pad) * 4)
    # f32 intermediates (enc_h, dec_h, q, schema_logits, ptr, CE temps), rough
    inter = bblk * (Sp * H + 3 * Tp * H + 2 * Tp * Vs_pad + 3 * Tp * Sp) * 4
    return stream + out + weights + inter


def _choose_bblk(B, Sp, Tp, H, Vs_pad, Vpad, logits_bytes, budget_bytes):
    """Batch block targeting ~512 MXU rows per step, bounded by the VMEM budget."""
    bblk = max(1, 512 // max(Sp, Tp, 1))
    bblk = min(bblk, B)
    while bblk > 1 and _vmem_estimate(bblk, Sp, Tp, H, Vs_pad, Vpad, logits_bytes) > budget_bytes:
        bblk -= 1
    return max(bblk, 1)


def _pointer_fwd_kernel(
    emb_src_ref,   # (bblk*Sp, H)  bf16   flattened source embeddings
    emb_tgt_ref,   # (bblk*Tp, H)  bf16   flattened target embeddings
    pmask_ref,     # (bblk, 1, Sp) f32    pointer mask (0 at padded src positions)
    labels_ref,    # (bblk*Tp, 1)  i32    labels shifted to the padded layout
    lmask_ref,     # (bblk*Tp, 1)  f32    decoder attention mask
    w_enc_ref,     # (H, H)      bf16
    b_enc_ref,     # (1, H)      f32
    w_dec_ref,     # (H, H)      bf16
    b_dec_ref,     # (1, H)      f32
    w_q_ref,       # (H, H)      bf16
    w_lm_ref,      # (H, Vs_pad) bf16    padded cols are zero
    b_lm_ref,      # (1, Vs_pad) f32     padded cols are NEG_INF
    logits_ref,    # (bblk*Tp, Vpad)     out, lane-dense padded logits
    losssum_ref,   # (1, 1, 1) f32       out, per-block partial loss sum
    count_ref,     # (1, 1, 1) f32       out, per-block partial mask count
):
    bblk, _, Sp = pmask_ref.shape
    H = w_enc_ref.shape[0]
    Vs_pad = w_lm_ref.shape[1]
    rows = emb_tgt_ref.shape[0]          # bblk * Tp
    Tp = rows // bblk
    Vpad = logits_ref.shape[-1]
    Sptr_pad = Vpad - Vs_pad

    # "Encoder" / "decoder": projection + nonlinearity. Batch is folded into the
    # M dimension, bf16 operands, f32 accumulate on the MXU.
    enc_h = jnp.tanh(
        jnp.dot(emb_src_ref[...], w_enc_ref[...], preferred_element_type=jnp.float32)
        + b_enc_ref[...])                                    # (bblk*Sp, H) f32
    dec_h = jnp.tanh(
        jnp.dot(emb_tgt_ref[...], w_dec_ref[...], preferred_element_type=jnp.float32)
        + b_dec_ref[...])                                    # (bblk*Tp, H) f32

    dec_b16 = dec_h.astype(jnp.bfloat16)
    schema_logits = (
        jnp.dot(dec_b16, w_lm_ref[...], preferred_element_type=jnp.float32)
        + b_lm_ref[...])                                     # (bblk*Tp, Vs_pad) f32
    q = jnp.dot(dec_b16, w_q_ref[...], preferred_element_type=jnp.float32)  # (bblk*Tp, H)

    # Pointer scores: block-diagonal over the batch, batched dot_general
    # contracting the last dims, bf16 operands / f32 accumulate.
    q3 = q.reshape(bblk, Tp, H).astype(jnp.bfloat16)
    e3 = enc_h.reshape(bblk, Sp, H).astype(jnp.bfloat16)
    ptr = jax.lax.dot_general(
        q3, e3, dimension_numbers=(((2,), (2,)), ((0,), (0,))),
        preferred_element_type=jnp.float32)                  # (bblk, Tp, Sp) f32
    ptr = jnp.where(pmask_ref[...] > 0.0, ptr, NEG_INF)      # mask broadcasts over Tp
    ptr2 = ptr.reshape(rows, Sp)

    # Lane-aligned direct stores (no full-width concat temp). Vs_pad and
    # Sptr_pad are multiples of 128, so both stores are dense and unmasked.
    logits_ref[:, :Vs_pad] = schema_logits.astype(logits_ref.dtype)
    if Sptr_pad == Sp:
        logits_ref[:, Vs_pad:] = ptr2.astype(logits_ref.dtype)
    else:
        tail = jnp.full((rows, Sptr_pad - Sp), NEG_INF, dtype=jnp.float32)
        logits_ref[:, Vs_pad:] = jnp.concatenate([ptr2, tail], axis=-1).astype(logits_ref.dtype)

    # Masked cross-entropy with a two-slab logsumexp: pad columns (schema pad is
    # NEG_INF via b_lm, pointer pad is NEG_INF via the mask) are never re-read
    # beyond these two slabs.
    m = jnp.maximum(jnp.max(schema_logits, axis=-1, keepdims=True),
                    jnp.max(ptr2, axis=-1, keepdims=True))                     # (rows, 1)
    ssum = (jnp.sum(jnp.exp(schema_logits - m), axis=-1, keepdims=True)
            + jnp.sum(jnp.exp(ptr2 - m), axis=-1, keepdims=True))
    lse = m + jnp.log(ssum)                                                    # (rows, 1)

    labels = labels_ref[...]                                                   # (rows, 1)
    iota_s = jax.lax.broadcasted_iota(jnp.int32, (rows, Vs_pad), 1)
    iota_p = jax.lax.broadcasted_iota(jnp.int32, (rows, Sp), 1) + Vs_pad
    picked = (jnp.sum(jnp.where(iota_s == labels, schema_logits, 0.0), axis=-1, keepdims=True)
              + jnp.sum(jnp.where(iota_p == labels, ptr2, 0.0), axis=-1, keepdims=True))
    nll = lse - picked                                                         # (rows, 1)
    lmask = lmask_ref[...]                                                     # (rows, 1)

    # Per-block partials (no cross-step accumulation -> grid axis stays parallel).
    losssum_ref[...] = jnp.sum(nll * lmask).reshape(1, 1, 1)
    count_ref[...] = jnp.sum(lmask).reshape(1, 1, 1)


def pointer_forward(emb_src, emb_tgt, pointer_mask, labels, label_mask, params,
                    logits_dtype=jnp.float32):
    """Fused pointer-network forward. Returns (loss, logits) like
    EncoderDecoderWPointerModel.forward with labels."""
    B, S, H = emb_src.shape
    _, T, _ = emb_tgt.shape
    V = params["w_lm"].shape[1]

    # Padded geometry: S/T to the bf16 sublane pack, schema vocab and pointer
    # slab to full lanes so all stores are lane-dense.
    Sp = _round_up(S, SUBLANE_PACK)
    Tp = _round_up(T, SUBLANE_PACK)
    Vs_pad = _round_up(V, LANE)
    Sptr_pad = _round_up(Sp, LANE)
    Vpad = Vs_pad + Sptr_pad

    logits_bytes = jnp.dtype(logits_dtype).itemsize
    vmem_cap = _vmem_capacity_bytes()
    bblk = _choose_bblk(B, Sp, Tp, H, Vs_pad, Vpad, logits_bytes,
                        budget_bytes=int(vmem_cap * 0.6))
    B_pad = _round_up(B, bblk)
    nblk = B_pad // bblk
    vmem_limit = max(32 * 1024 * 1024, min(int(vmem_cap * 0.85), 100 * 1024 * 1024))

    # --- wrapper-side padding (padded rows contribute nothing to the loss) ---
    pmask_f = pointer_mask.astype(jnp.float32)
    lmask_f = label_mask.astype(jnp.float32)
    labels_sh = jnp.where(labels < V, labels, labels + (Vs_pad - V)).astype(jnp.int32)

    emb_src_p = _pad_axis(_pad_axis(emb_src, Sp, 1), B_pad, 0)      # (B_pad, Sp, H)
    emb_tgt_p = _pad_axis(_pad_axis(emb_tgt, Tp, 1), B_pad, 0)      # (B_pad, Tp, H)
    pmask_p = _pad_axis(_pad_axis(pmask_f, Sp, 1), B_pad, 0)        # (B_pad, Sp)
    labels_p = _pad_axis(_pad_axis(labels_sh, Tp, 1), B_pad, 0)     # (B_pad, Tp)
    lmask_p = _pad_axis(_pad_axis(lmask_f, Tp, 1), B_pad, 0)        # (B_pad, Tp)

    # bf16 matmul operands; biases stay f32 (added after the f32-accumulated dot).
    emb_src_f = emb_src_p.astype(jnp.bfloat16).reshape(B_pad * Sp, H)
    emb_tgt_f = emb_tgt_p.astype(jnp.bfloat16).reshape(B_pad * Tp, H)
    pmask3 = pmask_p.reshape(B_pad, 1, Sp)
    labels2 = labels_p.reshape(B_pad * Tp, 1)
    lmask2 = lmask_p.reshape(B_pad * Tp, 1)

    w_enc = params["w_enc"].astype(jnp.bfloat16)
    w_dec = params["w_dec"].astype(jnp.bfloat16)
    w_q = params["w_q"].astype(jnp.bfloat16)
    # Schema vocab padded to Vs_pad: weight pad = 0, bias pad = NEG_INF so the
    # pad columns can never win the softmax / argmax.
    w_lm = jnp.pad(params["w_lm"], ((0, 0), (0, Vs_pad - V))).astype(jnp.bfloat16)
    b_lm = jnp.pad(params["b_lm"].astype(jnp.float32), ((0, 0), (0, Vs_pad - V)),
                   constant_values=NEG_INF)
    b_enc = params["b_enc"].astype(jnp.float32)
    b_dec = params["b_dec"].astype(jnp.float32)

    const2 = lambda b: (0, 0)   # resident weight blocks: same block every step

    grid_spec = pltpu.PrefetchScalarGridSpec(
        num_scalar_prefetch=0,
        grid=(nblk,),
        in_specs=[
            pl.BlockSpec((bblk * Sp, H), lambda b: (b, 0)),     # emb_src (flattened)
            pl.BlockSpec((bblk * Tp, H), lambda b: (b, 0)),     # emb_tgt (flattened)
            pl.BlockSpec((bblk, 1, Sp), lambda b: (b, 0, 0)),   # pointer mask
            pl.BlockSpec((bblk * Tp, 1), lambda b: (b, 0)),     # labels (shifted)
            pl.BlockSpec((bblk * Tp, 1), lambda b: (b, 0)),     # label mask
            pl.BlockSpec((H, H), const2),                       # w_enc
            pl.BlockSpec((1, H), const2),                       # b_enc
            pl.BlockSpec((H, H), const2),                       # w_dec
            pl.BlockSpec((1, H), const2),                       # b_dec
            pl.BlockSpec((H, H), const2),                       # w_q
            pl.BlockSpec((H, Vs_pad), const2),                  # w_lm (padded)
            pl.BlockSpec((1, Vs_pad), const2),                  # b_lm (padded)
        ],
        out_specs=[
            pl.BlockSpec((bblk * Tp, Vpad), lambda b: (b, 0)),  # padded logits
            pl.BlockSpec((1, 1, 1), lambda b: (b, 0, 0)),       # per-block loss sum
            pl.BlockSpec((1, 1, 1), lambda b: (b, 0, 0)),       # per-block mask count
        ],
    )

    logits_pad, loss_parts, count_parts = pl.pallas_call(
        _pointer_fwd_kernel,
        grid_spec=grid_spec,
        out_shape=(
            jax.ShapeDtypeStruct((B_pad * Tp, Vpad), logits_dtype),
            jax.ShapeDtypeStruct((nblk, 1, 1), jnp.float32),
            jax.ShapeDtypeStruct((nblk, 1, 1), jnp.float32),
        ),
        compiler_params=pltpu.CompilerParams(
            # No cross-step accumulators anymore -> batch-block axis is parallel
            # (lets Mosaic shard blocks across v7x's two TensorCores).
            dimension_semantics=("parallel",),
            vmem_limit_bytes=vmem_limit,
        ),
    )(
        emb_src_f, emb_tgt_f, pmask3, labels2, lmask2,
        w_enc, b_enc, w_dec, b_dec, w_q, w_lm, b_lm,
    )

    # Re-assemble the original [schema | pointer] layout and drop padding.
    logits3 = logits_pad.reshape(B_pad, Tp, Vpad)[:B, :T]
    logits = jnp.concatenate(
        [logits3[..., :V], logits3[..., Vs_pad:Vs_pad + S]], axis=-1).astype(jnp.float32)
    loss = jnp.sum(loss_parts) / jnp.maximum(jnp.sum(count_parts), 1.0)
    return loss, logits


def _reference_forward(emb_src, emb_tgt, pointer_mask, labels, label_mask, params):
    """Pure-JAX f32 reference for correctness checking."""
    enc_h = jnp.tanh(emb_src @ params["w_enc"] + params["b_enc"])
    dec_h = jnp.tanh(emb_tgt @ params["w_dec"] + params["b_dec"])
    schema_logits = dec_h @ params["w_lm"] + params["b_lm"]
    q = dec_h @ params["w_q"]
    ptr = jnp.einsum("bth,bsh->bts", q, enc_h)
    ptr = jnp.where(pointer_mask[:, None, :] > 0, ptr, NEG_INF)
    logits = jnp.concatenate([schema_logits, ptr], axis=-1)
    logp = jax.nn.log_softmax(logits, axis=-1)
    picked = jnp.take_along_axis(logp, labels[..., None].astype(jnp.int32), axis=-1)[..., 0]
    nll = -picked
    m = label_mask.astype(jnp.float32)
    loss = jnp.sum(nll * m) / jnp.maximum(jnp.sum(m), 1.0)
    return loss, logits


if __name__ == "__main__":
    # Small, deterministic example consistent with the module's forward.
    B, S, T, H, V = 2, 8, 8, 32, 16          # batch, src len, tgt len, hidden, schema vocab
    SRC_VOCAB = 64

    key = jax.random.PRNGKey(0)
    keys = jax.random.split(key, 12)

    scale = 0.05
    params = {
        "src_emb": scale * jax.random.normal(keys[0], (SRC_VOCAB, H), jnp.float32),
        "tgt_emb": scale * jax.random.normal(keys[1], (V + S, H), jnp.float32),
        "w_enc": scale * jax.random.normal(keys[2], (H, H), jnp.float32),
        "b_enc": jnp.zeros((1, H), jnp.float32),
        "w_dec": scale * jax.random.normal(keys[3], (H, H), jnp.float32),
        "b_dec": jnp.zeros((1, H), jnp.float32),
        "w_q": scale * jax.random.normal(keys[4], (H, H), jnp.float32),
        "w_lm": scale * jax.random.normal(keys[5], (H, V), jnp.float32),
        "b_lm": jnp.zeros((1, V), jnp.float32),
    }

    # Batch: input_ids, pointer_mask, decoder_input_ids, labels, decoder_attention_mask.
    input_ids = jax.random.randint(keys[6], (B, S), 0, SRC_VOCAB)
    decoder_input_ids = jax.random.randint(keys[7], (B, T), 0, V + S)
    pointer_mask = (jax.random.uniform(keys[9], (B, S)) > 0.3).astype(jnp.float32)
    decoder_attention_mask = (jax.random.uniform(keys[10], (B, T)) > 0.1).astype(jnp.float32)

    # Labels in [0, V+S); pointer labels are remapped to the schema range if they
    # would point at a masked source position (keeps the CE well-conditioned).
    raw_labels = jax.random.randint(keys[8], (B, T), 0, V + S)
    ptr_idx = jnp.clip(raw_labels - V, 0, S - 1)
    ptr_ok = jnp.take_along_axis(pointer_mask, ptr_idx, axis=1) > 0
    labels = jnp.where((raw_labels < V) | ptr_ok, raw_labels, raw_labels % V)

    # Embedding lookups (glue, plain JAX).
    emb_src = params["src_emb"][input_ids]            # (B, S, H)
    emb_tgt = params["tgt_emb"][decoder_input_ids]    # (B, T, H)

    loss, logits = pointer_forward(
        emb_src, emb_tgt, pointer_mask, labels, decoder_attention_mask, params
    )
    jax.block_until_ready((loss, logits))

    # Correctness check vs the pure-f32 JAX reference (bf16 matmul operands ->
    # loosened tolerances).
    ref_loss, ref_logits = _reference_forward(
        emb_src, emb_tgt, pointer_mask, labels, decoder_attention_mask, params
    )
    assert logits.shape == ref_logits.shape, "logits shape mismatch"
    assert jnp.allclose(logits, ref_logits, atol=5e-3, rtol=1e-2), "logits mismatch"
    assert jnp.allclose(loss, ref_loss, atol=5e-3, rtol=1e-2), "loss mismatch"

    print("KERNEL_OK")
</pallas_src>

<mosaic_0001>
module attributes {stable_mosaic.version = 11 : i64} {
  func.func @_pointer_fwd_kernel(%arg0: i32, %arg1: memref<32x32xbf16, #tpu.memory_space<vmem>>, %arg2: memref<32x32xbf16, #tpu.memory_space<vmem>>, %arg3: memref<2x1x16xf32, #tpu.memory_space<vmem>>, %arg4: memref<32x1xi32, #tpu.memory_space<vmem>>, %arg5: memref<32x1xf32, #tpu.memory_space<vmem>>, %arg6: memref<32x32xbf16, #tpu.memory_space<vmem>>, %arg7: memref<1x32xf32, #tpu.memory_space<vmem>>, %arg8: memref<32x32xbf16, #tpu.memory_space<vmem>>, %arg9: memref<1x32xf32, #tpu.memory_space<vmem>>, %arg10: memref<32x32xbf16, #tpu.memory_space<vmem>>, %arg11: memref<32x128xbf16, #tpu.memory_space<vmem>>, %arg12: memref<1x128xf32, #tpu.memory_space<vmem>>, %arg13: memref<32x256xf32, #tpu.memory_space<vmem>>, %arg14: memref<1x1x1xf32, #tpu.memory_space<vmem>>, %arg15: memref<1x1x1xf32, #tpu.memory_space<vmem>>) attributes {dimension_semantics = [#tpu.dimension_semantics<parallel>], iteration_bounds = array<i64: 1>, scalar_prefetch = 0 : i64, scratch_operands = 0 : i64, tpu.core_type = #tpu.core_type<tc>, window_params = [{transform_indices = @transform_0, window_bounds = array<i64: 32, 32>}, {transform_indices = @transform_1, window_bounds = array<i64: 32, 32>}, {transform_indices = @transform_2, window_bounds = array<i64: 2, 1, 16>}, {transform_indices = @transform_3, window_bounds = array<i64: 32, 1>}, {transform_indices = @transform_4, window_bounds = array<i64: 32, 1>}, {pipeline_mode = #tpu.pipeline_mode<synchronous>, transform_indices = @transform_5, window_bounds = array<i64: 32, 32>}, {pipeline_mode = #tpu.pipeline_mode<synchronous>, transform_indices = @transform_6, window_bounds = array<i64: 1, 32>}, {pipeline_mode = #tpu.pipeline_mode<synchronous>, transform_indices = @transform_7, window_bounds = array<i64: 32, 32>}, {pipeline_mode = #tpu.pipeline_mode<synchronous>, transform_indices = @transform_8, window_bounds = array<i64: 1, 32>}, {pipeline_mode = #tpu.pipeline_mode<synchronous>, transform_indices = @transform_9, window_bounds = array<i64: 32, 32>}, {pipeline_mode = #tpu.pipeline_mode<synchronous>, transform_indices = @transform_10, window_bounds = array<i64: 32, 128>}, {pipeline_mode = #tpu.pipeline_mode<synchronous>, transform_indices = @transform_11, window_bounds = array<i64: 1, 128>}, {transform_indices = @transform_12, window_bounds = array<i64: 32, 256>}, {transform_indices = @transform_13, window_bounds = array<i64: 1, 1, 1>}, {transform_indices = @transform_14, window_bounds = array<i64: 1, 1, 1>}]} {
    %c0 = arith.constant 0 : index
    %c0_0 = arith.constant 0 : index
    %0 = vector.load %arg1[%c0, %c0_0] : memref<32x32xbf16, #tpu.memory_space<vmem>>, vector<32x32xbf16>
    %c0_1 = arith.constant 0 : index
    %c0_2 = arith.constant 0 : index
    %1 = vector.load %arg6[%c0_1, %c0_2] : memref<32x32xbf16, #tpu.memory_space<vmem>>, vector<32x32xbf16>
    %cst = arith.constant dense<0.000000e+00> : vector<32x32xf32>
    %2 = tpu.matmul %0, %1, %cst {dimension_numbers = #tpu.dot_dimension_numbers<[1], [0], [0], [1], [0, 0, 1, 1], [], []>} : vector<32x32xbf16>, vector<32x32xbf16>, vector<32x32xf32> -> vector<32x32xf32>
    %c0_3 = arith.constant 0 : index
    %c0_4 = arith.constant 0 : index
    %3 = vector.load %arg7[%c0_3, %c0_4] : memref<1x32xf32, #tpu.memory_space<vmem>>, vector<1x32xf32>
    %4 = vector.broadcast %3 : vector<1x32xf32> to vector<32x32xf32>
    %5 = arith.addf %2, %4 : vector<32x32xf32>
    %6 = math.tanh %5 : vector<32x32xf32>
    %c0_5 = arith.constant 0 : index
    %c0_6 = arith.constant 0 : index
    %7 = vector.load %arg2[%c0_5, %c0_6] : memref<32x32xbf16, #tpu.memory_space<vmem>>, vector<32x32xbf16>
    %c0_7 = arith.constant 0 : index
    %c0_8 = arith.constant 0 : index
    %8 = vector.load %arg8[%c0_7, %c0_8] : memref<32x32xbf16, #tpu.memory_space<vmem>>, vector<32x32xbf16>
    %cst_9 = arith.constant dense<0.000000e+00> : vector<32x32xf32>
    %9 = tpu.matmul %7, %8, %cst_9 {dimension_numbers = #tpu.dot_dimension_numbers<[1], [0], [0], [1], [0, 0, 1, 1], [], []>} : vector<32x32xbf16>, vector<32x32xbf16>, vector<32x32xf32> -> vector<32x32xf32>
    %c0_10 = arith.constant 0 : index
    %c0_11 = arith.constant 0 : index
    %10 = vector.load %arg9[%c0_10, %c0_11] : memref<1x32xf32, #tpu.memory_space<vmem>>, vector<1x32xf32>
    %11 = vector.broadcast %10 : vector<1x32xf32> to vector<32x32xf32>
    %12 = arith.addf %9, %11 : vector<32x32xf32>
    %13 = math.tanh %12 : vector<32x32xf32>
    %14 = arith.truncf %13 : vector<32x32xf32> to vector<32x32xbf16>
    %c0_12 = arith.constant 0 : index
    %c0_13 = arith.constant 0 : index
    %15 = vector.load %arg11[%c0_12, %c0_13] : memref<32x128xbf16, #tpu.memory_space<vmem>>, vector<32x128xbf16>
    %cst_14 = arith.constant dense<0.000000e+00> : vector<32x128xf32>
    %16 = tpu.matmul %14, %15, %cst_14 {dimension_numbers = #tpu.dot_dimension_numbers<[1], [0], [0], [1], [0, 0, 1, 1], [], []>} : vector<32x32xbf16>, vector<32x128xbf16>, vector<32x128xf32> -> vector<32x128xf32>
    %c0_15 = arith.constant 0 : index
    %c0_16 = arith.constant 0 : index
    %17 = vector.load %arg12[%c0_15, %c0_16] : memref<1x128xf32, #tpu.memory_space<vmem>>, vector<1x128xf32>
    %18 = vector.broadcast %17 : vector<1x128xf32> to vector<32x128xf32>
    %19 = arith.addf %16, %18 : vector<32x128xf32>
    %c0_17 = arith.constant 0 : index
    %c0_18 = arith.constant 0 : index
    %20 = vector.load %arg10[%c0_17, %c0_18] : memref<32x32xbf16, #tpu.memory_space<vmem>>, vector<32x32xbf16>
    %cst_19 = arith.constant dense<0.000000e+00> : vector<32x32xf32>
    %21 = tpu.matmul %14, %20, %cst_19 {dimension_numbers = #tpu.dot_dimension_numbers<[1], [0], [0], [1], [0, 0, 1, 1], [], []>} : vector<32x32xbf16>, vector<32x32xbf16>, vector<32x32xf32> -> vector<32x32xf32>
    %22 = vector.shape_cast %21 : vector<32x32xf32> to vector<2x16x32xf32>
    %23 = arith.truncf %22 : vector<2x16x32xf32> to vector<2x16x32xbf16>
    %24 = vector.shape_cast %6 : vector<32x32xf32> to vector<2x16x32xf32>
    %25 = arith.truncf %24 : vector<2x16x32xf32> to vector<2x16x32xbf16>
    %cst_20 = arith.constant dense<0.000000e+00> : vector<2x16x16xf32>
    %26 = tpu.matmul %23, %25, %cst_20 {dimension_numbers = #tpu.dot_dimension_numbers<[2], [2], [1], [1], [0, 0, 0, 1, 1, 1], [0], [0]>} : vector<2x16x32xbf16>, vector<2x16x32xbf16>, vector<2x16x16xf32> -> vector<2x16x16xf32>
    %c0_21 = arith.constant 0 : index
    %c0_22 = arith.constant 0 : index
    %c0_23 = arith.constant 0 : index
    %27 = vector.load %arg3[%c0_21, %c0_22, %c0_23] : memref<2x1x16xf32, #tpu.memory_space<vmem>>, vector<2x1x16xf32>
    %cst_24 = arith.constant 0.000000e+00 : f32
    %28 = vector.broadcast %cst_24 : f32 to vector<2x1x16xf32>
    %29 = arith.cmpf ogt, %27, %28 : vector<2x1x16xf32>
    %cst_25 = arith.constant -1.000000e+09 : f32
    %30 = vector.shape_cast %29 : vector<2x1x16xi1> to vector<2x1x16xi1>
    %31 = vector.broadcast %30 : vector<2x1x16xi1> to vector<2x16x16xi1>
    %32 = vector.broadcast %cst_25 : f32 to vector<2x16x16xf32>
    %33 = arith.select %31, %26, %32 : vector<2x16x16xi1>, vector<2x16x16xf32>
    %34 = vector.shape_cast %33 : vector<2x16x16xf32> to vector<32x16xf32>
    %c0_26 = arith.constant 0 : index
    %c0_27 = arith.constant 0 : index
    %35 = vector.load %arg13[%c0_26, %c0_27] : memref<32x256xf32, #tpu.memory_space<vmem>>, vector<32x128xf32>
    tpu.vector_store %arg13[%c0_26, %c0_27], %19 {strides = array<i32>} : memref<32x256xf32, #tpu.memory_space<vmem>>, vector<32x128xf32>,
    %cst_28 = arith.constant -1.000000e+09 : f32
    %36 = vector.broadcast %cst_28 : f32 to vector<32x112xf32>
    %37 = tpu.concatenate %34, %36 in 1 : vector<32x16xf32>, vector<32x112xf32> -> vector<32x128xf32>
    %c0_29 = arith.constant 0 : index
    %c128 = arith.constant 128 : index
    %38 = vector.load %arg13[%c0_29, %c128] : memref<32x256xf32, #tpu.memory_space<vmem>>, vector<32x128xf32>
    tpu.vector_store %arg13[%c0_29, %c128], %37 {strides = array<i32>} : memref<32x256xf32, #tpu.memory_space<vmem>>, vector<32x128xf32>,
    %cst_30 = arith.constant dense<0xFF800000> : vector<32xf32>
    %39 = vector.multi_reduction <maximumf>, %19, %cst_30 [1] : vector<32x128xf32> to vector<32xf32>
    %40 = vector.shape_cast %39 : vector<32xf32> to vector<32x1xf32>
    %cst_31 = arith.constant dense<0xFF800000> : vector<32xf32>
    %41 = vector.multi_reduction <maximumf>, %34, %cst_31 [1] : vector<32x16xf32> to vector<32xf32>
    %42 = vector.shape_cast %41 : vector<32xf32> to vector<32x1xf32>
    %43 = arith.maximumf %40, %42 : vector<32x1xf32>
    %44 = vector.broadcast %43 : vector<32x1xf32> to vector<32x128xf32>
    %45 = arith.subf %19, %44 : vector<32x128xf32>
    %46 = math.exp %45 : vector<32x128xf32>
    %cst_32 = arith.constant dense<0.000000e+00> : vector<32xf32>
    %47 = vector.multi_reduction <add>, %46, %cst_32 [1] : vector<32x128xf32> to vector<32xf32>
    %48 = vector.shape_cast %47 : vector<32xf32> to vector<32x1xf32>
    %49 = vector.broadcast %43 : vector<32x1xf32> to vector<32x16xf32>
    %50 = arith.subf %34, %49 : vector<32x16xf32>
    %51 = math.exp %50 : vector<32x16xf32>
    %cst_33 = arith.constant dense<0.000000e+00> : vector<32xf32>
    %52 = vector.multi_reduction <add>, %51, %cst_33 [1] : vector<32x16xf32> to vector<32xf32>
    %53 = vector.shape_cast %52 : vector<32xf32> to vector<32x1xf32>
    %54 = arith.addf %48, %53 : vector<32x1xf32>
    %55 = math.log %54 : vector<32x1xf32>
    %56 = arith.addf %43, %55 : vector<32x1xf32>
    %c0_34 = arith.constant 0 : index
    %c0_35 = arith.constant 0 : index
    %57 = vector.load %arg4[%c0_34, %c0_35] : memref<32x1xi32, #tpu.memory_space<vmem>>, vector<32x1xi32>
    %58 = tpu.iota {dimensions = array<i32: 1>} : vector<32x128xi32>
    %59 = tpu.iota {dimensions = array<i32: 1>} : vector<32x16xi32>
    %c128_i32 = arith.constant 128 : i32
    %60 = vector.broadcast %c128_i32 : i32 to vector<32x16xi32>
    %61 = arith.addi %59, %60 : vector<32x16xi32>
    %62 = vector.broadcast %57 : vector<32x1xi32> to vector<32x128xi32>
    %63 = arith.cmpi eq, %58, %62 : vector<32x128xi32>
    %cst_36 = arith.constant 0.000000e+00 : f32
    %64 = vector.broadcast %cst_36 : f32 to vector<32x128xf32>
    %65 = arith.select %63, %19, %64 : vector<32x128xi1>, vector<32x128xf32>
    %cst_37 = arith.constant dense<0.000000e+00> : vector<32xf32>
    %66 = vector.multi_reduction <add>, %65, %cst_37 [1] : vector<32x128xf32> to vector<32xf32>
    %67 = vector.shape_cast %66 : vector<32xf32> to vector<32x1xf32>
    %68 = vector.broadcast %57 : vector<32x1xi32> to vector<32x16xi32>
    %69 = arith.cmpi eq, %61, %68 : vector<32x16xi32>
    %cst_38 = arith.constant 0.000000e+00 : f32
    %70 = vector.broadcast %cst_38 : f32 to vector<32x16xf32>
    %71 = arith.select %69, %34, %70 : vector<32x16xi1>, vector<32x16xf32>
    %cst_39 = arith.constant dense<0.000000e+00> : vector<32xf32>
    %72 = vector.multi_reduction <add>, %71, %cst_39 [1] : vector<32x16xf32> to vector<32xf32>
    %73 = vector.shape_cast %72 : vector<32xf32> to vector<32x1xf32>
    %74 = arith.addf %67, %73 : vector<32x1xf32>
    %75 = arith.subf %56, %74 : vector<32x1xf32>
    %c0_40 = arith.constant 0 : index
    %c0_41 = arith.constant 0 : index
    %76 = vector.load %arg5[%c0_40, %c0_41] : memref<32x1xf32, #tpu.memory_space<vmem>>, vector<32x1xf32>
    %77 = arith.mulf %75, %76 : vector<32x1xf32>
    %78 = vector.shape_cast %77 : vector<32x1xf32> to vector<1x32x1xf32>
    %cst_42 = arith.constant dense<0.000000e+00> : vector<1xf32>
    %79 = vector.multi_reduction <add>, %78, %cst_42 [1, 2] : vector<1x32x1xf32> to vector<1xf32>
    %80 = vector.shape_cast %79 : vector<1xf32> to vector<1x1x1xf32>
    %81 = vector.extract %80[0, 0, 0] : f32 from vector<1x1x1xf32>
    %82 = vector.broadcast %81 : f32 to vector<1x1x1xf32>
    %c0_43 = arith.constant 0 : index
    %c0_44 = arith.constant 0 : index
    %c0_45 = arith.constant 0 : index
    %83 = vector.load %arg14[%c0_43, %c0_44, %c0_45] : memref<1x1x1xf32, #tpu.memory_space<vmem>>, vector<1x1x1xf32>
    tpu.vector_store %arg14[%c0_43, %c0_44, %c0_45], %82 {strides = array<i32>} : memref<1x1x1xf32, #tpu.memory_space<vmem>>, vector<1x1x1xf32>,
    %84 = vector.shape_cast %76 : vector<32x1xf32> to vector<1x32x1xf32>
    %cst_46 = arith.constant dense<0.000000e+00> : vector<1xf32>
    %85 = vector.multi_reduction <add>, %84, %cst_46 [1, 2] : vector<1x32x1xf32> to vector<1xf32>
    %86 = vector.shape_cast %85 : vector<1xf32> to vector<1x1x1xf32>
    %87 = vector.extract %86[0, 0, 0] : f32 from vector<1x1x1xf32>
    %88 = vector.broadcast %87 : f32 to vector<1x1x1xf32>
    %c0_47 = arith.constant 0 : index
    %c0_48 = arith.constant 0 : index
    %c0_49 = arith.constant 0 : index
    %89 = vector.load %arg15[%c0_47, %c0_48, %c0_49] : memref<1x1x1xf32, #tpu.memory_space<vmem>>, vector<1x1x1xf32>
    tpu.vector_store %arg15[%c0_47, %c0_48, %c0_49], %88 {strides = array<i32>} : memref<1x1x1xf32, #tpu.memory_space<vmem>>, vector<1x1x1xf32>,
    return
  }
  func.func @transform_0(%arg0: i32) -> (i32, i32) {
    %c0_i32 = arith.constant 0 : i32
    %c0_i32_0 = arith.constant 0 : i32
    return %arg0, %c0_i32 : i32, i32
  }
  func.func @transform_1(%arg0: i32) -> (i32, i32) {
    %c0_i32 = arith.constant 0 : i32
    %c0_i32_0 = arith.constant 0 : i32
    return %arg0, %c0_i32 : i32, i32
  }
  func.func @transform_2(%arg0: i32) -> (i32, i32, i32) {
    %c0_i32 = arith.constant 0 : i32
    %c0_i32_0 = arith.constant 0 : i32
    %c0_i32_1 = arith.constant 0 : i32
    return %arg0, %c0_i32, %c0_i32_0 : i32, i32, i32
  }
  func.func @transform_3(%arg0: i32) -> (i32, i32) {
    %c0_i32 = arith.constant 0 : i32
    %c0_i32_0 = arith.constant 0 : i32
    return %arg0, %c0_i32 : i32, i32
  }
  func.func @transform_4(%arg0: i32) -> (i32, i32) {
    %c0_i32 = arith.constant 0 : i32
    %c0_i32_0 = arith.constant 0 : i32
    return %arg0, %c0_i32 : i32, i32
  }
  func.func @transform_5(%arg0: i32) -> (i32, i32) {
    %c0_i32 = arith.constant 0 : i32
    %c0_i32_0 = arith.constant 0 : i32
    %c0_i32_1 = arith.constant 0 : i32
    return %c0_i32, %c0_i32_0 : i32, i32
  }
  func.func @transform_6(%arg0: i32) -> (i32, i32) {
    %c0_i32 = arith.constant 0 : i32
    %c0_i32_0 = arith.constant 0 : i32
    %c0_i32_1 = arith.constant 0 : i32
    return %c0_i32, %c0_i32_0 : i32, i32
  }
  func.func @transform_7(%arg0: i32) -> (i32, i32) {
    %c0_i32 = arith.constant 0 : i32
    %c0_i32_0 = arith.constant 0 : i32
    %c0_i32_1 = arith.constant 0 : i32
    return %c0_i32, %c0_i32_0 : i32, i32
  }
  func.func @transform_8(%arg0: i32) -> (i32, i32) {
    %c0_i32 = arith.constant 0 : i32
    %c0_i32_0 = arith.constant 0 : i32
    %c0_i32_1 = arith.constant 0 : i32
    return %c0_i32, %c0_i32_0 : i32, i32
  }
  func.func @transform_9(%arg0: i32) -> (i32, i32) {
    %c0_i32 = arith.constant 0 : i32
    %c0_i32_0 = arith.constant 0 : i32
    %c0_i32_1 = arith.constant 0 : i32
    return %c0_i32, %c0_i32_0 : i32, i32
  }
  func.func @transform_10(%arg0: i32) -> (i32, i32) {
    %c0_i32 = arith.constant 0 : i32
    %c0_i32_0 = arith.constant 0 : i32
    %c0_i32_1 = arith.constant 0 : i32
    return %c0_i32, %c0_i32_0 : i32, i32
  }
  func.func @transform_11(%arg0: i32) -> (i32, i32) {
    %c0_i32 = arith.constant 0 : i32
    %c0_i32_0 = arith.constant 0 : i32
    %c0_i32_1 = arith.constant 0 : i32
    return %c0_i32, %c0_i32_0 : i32, i32
  }
  func.func @transform_12(%arg0: i32) -> (i32, i32) {
    %c0_i32 = arith.constant 0 : i32
    %c0_i32_0 = arith.constant 0 : i32
    return %arg0, %c0_i32 : i32, i32
  }
  func.func @transform_13(%arg0: i32) -> (i32, i32, i32) {
    %c0_i32 = arith.constant 0 : i32
    %c0_i32_0 = arith.constant 0 : i32
    %c0_i32_1 = arith.constant 0 : i32
    return %arg0, %c0_i32, %c0_i32_0 : i32, i32, i32
  }
  func.func @transform_14(%arg0: i32) -> (i32, i32, i32) {
    %c0_i32 = arith.constant 0 : i32
    %c0_i32_0 = arith.constant 0 : i32
    %c0_i32_1 = arith.constant 0 : i32
    return %arg0, %c0_i32, %c0_i32_0 : i32, i32, i32
  }
}

</mosaic_0001>

<llo_original>
// kernel: tpu_custom_call.1
$region0: #{tpu_custom_call.1}
  #allocation0 [shape = 'u32[]', space=smem, size = 0x4, offset = 0x4, fixed_abs, tag = 'smem constant byte address 0x4 - core index']
  #allocation1 [shape = 'u32[144,128]{1,0:T(1,128)}', space=vmem, size = 0x12000, scoped, tag = 'internal scratch']
  %s0 = inlined_call_operand.vmem [shape: bf16[32,32], index: 0, kind: input, shape index: {}]
  %s1 = inlined_call_operand.vmem [shape: bf16[32,32], index: 1, kind: input, shape index: {}]
  %s2 = inlined_call_operand.hbm [shape: f32[2,1,16], index: 2, kind: input, shape index: {}]
  %s3 = inlined_call_operand.vmem [shape: s32[32,1], index: 3, kind: input, shape index: {}]
  %s4 = inlined_call_operand.vmem [shape: f32[32,1], index: 4, kind: input, shape index: {}]
  %s5 = inlined_call_operand.vmem [shape: bf16[32,32], index: 5, kind: input, shape index: {}]
  %s6 = inlined_call_operand.hbm [shape: f32[1,32], index: 6, kind: input, shape index: {}]
  %s7 = inlined_call_operand.vmem [shape: bf16[32,32], index: 7, kind: input, shape index: {}]
  %s8 = inlined_call_operand.hbm [shape: f32[1,32], index: 8, kind: input, shape index: {}]
  %s9 = inlined_call_operand.vmem [shape: bf16[32,32], index: 9, kind: input, shape index: {}]
  %s10 = inlined_call_operand.hbm [shape: bf16[32,128], index: 10, kind: input, shape index: {}]
  %s11 = inlined_call_operand.vmem [shape: f32[1,128], index: 11, kind: input, shape index: {}]
  %s12 = inlined_call_operand.hbm [shape: f32[32,256], index: 12, kind: output, shape index: {0}]
  %s13 = inlined_call_operand.hbm [shape: f32[1,1,1], index: 13, kind: output, shape index: {1}]
  %s14 = inlined_call_operand.hbm [shape: f32[1,1,1], index: 14, kind: output, shape index: {2}]
  %15 = xla_tuple %s12, %s13, %s14
  %s16 = sld [smem:[#allocation0]]
  $region90: #{tpu_custom_call.1} parent=0
    _
  %s18 = ssub.s32 1, %s16
  %s19 = scalar_select 0, %s18, %s16
  $region1: #{tpu_custom_call.1} parent=0
    #allocation2 [shape = 'u8[1024]{0}', space=vmem, size = 0x400, scoped, tag = 'input window, operand 2, single buffered']
    #allocation3 [shape = 's32[1]{0}', space=sflag, size = 0x4, scoped, tag = 'scoped memory for tpu_custom_call.1']
    #allocation4 [shape = 's32[1]{0}', space=sflag, size = 0x4, scoped, tag = 'scoped memory for tpu_custom_call.1']
    #allocation5 [shape = 'u8[512]{0}', space=vmem, size = 0x400, scoped, tag = 'input window, operand 6, single buffered']
    #allocation6 [shape = 's32[1]{0}', space=sflag, size = 0x4, scoped, tag = 'scoped memory for tpu_custom_call.1']
    #allocation7 [shape = 'u8[512]{0}', space=vmem, size = 0x400, scoped, tag = 'input window, operand 8, single buffered']
    #allocation8 [shape = 'u8[8192]{0}', space=vmem, size = 0x2000, scoped, tag = 'input window, operand 10, single buffered']
    #allocation9 [shape = 's32[1]{0}', space=sflag, size = 0x4, scoped, tag = 'scoped memory for tpu_custom_call.1']
    #allocation10 [shape = 'u8[32768]{0}', space=vmem, size = 0x8000, scoped, tag = 'output window, operand 0, single buffered']
    #allocation11 [shape = 'u8[512]{0}', space=vmem, size = 0x400, scoped, tag = 'output window, operand 1, single buffered']
    #allocation12 [shape = 's32[1]{0}', space=sflag, size = 0x4, scoped, tag = 'scoped memory for tpu_custom_call.1']
    #allocation13 [shape = 'u8[512]{0}', space=vmem, size = 0x400, scoped, tag = 'output window, operand 2, single buffered']
    %20 = vsyncpa [#allocation3], 0
    %21 = vsyncpa [#allocation6], 0
    %22 = vsyncpa [#allocation9], 0
    %23 = vsyncpa [#allocation4], 0
    %24 = vsyncpa [#allocation12], 0
    // Predicated region
    $region2: #{tpu_custom_call.1} parent=1 // pred_check
      _
    $region3: #{tpu_custom_call.1} parent=1 // pred_check_branch
      %26 = sbr.rel (0) target = $region5
    $region4: #{tpu_custom_call.1} parent=1 // pred_region
      _
    $region5: #{tpu_custom_call.1} parent=1 // pred_fallthru
      _
    // Predicated region
    $region6: #{tpu_custom_call.1} parent=1 // pred_check
      _
    $region7: #{tpu_custom_call.1} parent=1 // pred_check_branch
      %28 = sbr.rel (0) target = $region9
    $region8: #{tpu_custom_call.1} parent=1 // pred_region
      _
    $region9: #{tpu_custom_call.1} parent=1 // pred_fallthru
      _
    // Predicated region
    $region10: #{tpu_custom_call.1} parent=1 // pred_check
      _
    $region11: #{tpu_custom_call.1} parent=1 // pred_check_branch
      %30 = sbr.rel (0) target = $region13
    $region12: #{tpu_custom_call.1} parent=1 // pred_region
      %s32 = ssub.s32 32, 32
      %33 = vsyncadd [#allocation3], %s32
      %s34 = sshll.u32 [#allocation2], 4
      %s35 = int_to_ptr.vmem [resolvable:$true] %s34
      %40 = dma.hbm_to_vmem [thread:$0]  %s2, 32, %s35, [#allocation3], 16, 16, 1
    $region13: #{tpu_custom_call.1} parent=1 // pred_fallthru
      _
    // Predicated region
    $region14: #{tpu_custom_call.1} parent=1 // pred_check
      _
    $region15: #{tpu_custom_call.1} parent=1 // pred_check_branch
      %42 = sbr.rel (0) target = $region17
    $region16: #{tpu_custom_call.1} parent=1 // pred_region
      _
    $region17: #{tpu_custom_call.1} parent=1 // pred_fallthru
      _
    // Predicated region
    $region18: #{tpu_custom_call.1} parent=1 // pred_check
      _
    $region19: #{tpu_custom_call.1} parent=1 // pred_check_branch
      %44 = sbr.rel (0) target = $region21
    $region20: #{tpu_custom_call.1} parent=1 // pred_region
      _
    $region21: #{tpu_custom_call.1} parent=1 // pred_fallthru
      _
    // Predicated region
    $region22: #{tpu_custom_call.1} parent=1 // pred_check
      _
    $region23: #{tpu_custom_call.1} parent=1 // pred_check_branch
      %46 = sbr.rel (0) target = $region25
    $region24: #{tpu_custom_call.1} parent=1 // pred_region
      _
    $region25: #{tpu_custom_call.1} parent=1 // pred_fallthru
      _
    // Predicated region
    $region26: #{tpu_custom_call.1} parent=1 // pred_check
      _
    $region27: #{tpu_custom_call.1} parent=1 // pred_check_branch
      %48 = sbr.rel (0) target = $region29
    $region28: #{tpu_custom_call.1} parent=1 // pred_region
      %s50 = ssub.s32 16, 16
      %51 = vsyncadd [#allocation6], %s50
      %s53 = sshll.u32 [#allocation5], 4
      %s54 = int_to_ptr.vmem [resolvable:$true] %s53
      %56 = dma.hbm_to_vmem [thread:$0]  %s6, 16, %s54, [#allocation6]
    $region29: #{tpu_custom_call.1} parent=1 // pred_fallthru
      _
    // Predicated region
    $region30: #{tpu_custom_call.1} parent=1 // pred_check
      _
    $region31: #{tpu_custom_call.1} parent=1 // pred_check_branch
      %58 = sbr.rel (0) target = $region33
    $region32: #{tpu_custom_call.1} parent=1 // pred_region
      _
    $region33: #{tpu_custom_call.1} parent=1 // pred_fallthru
      _
    // Predicated region
    $region34: #{tpu_custom_call.1} parent=1 // pred_check
      _
    $region35: #{tpu_custom_call.1} parent=1 // pred_check_branch
      %60 = sbr.rel (0) target = $region37
    $region36: #{tpu_custom_call.1} parent=1 // pred_region
      %s62 = ssub.s32 16, 16
      %63 = vsyncadd [#allocation6], %s62
      %s65 = sshll.u32 [#allocation7], 4
      %s66 = int_to_ptr.vmem [resolvable:$true] %s65
      %68 = dma.hbm_to_vmem [thread:$0]  %s8, 16, %s66, [#allocation6]
    $region37: #{tpu_custom_call.1} parent=1 // pred_fallthru
      _
    // Predicated region
    $region38: #{tpu_custom_call.1} parent=1 // pred_check
      _
    $region39: #{tpu_custom_call.1} parent=1 // pred_check_branch
      %70 = sbr.rel (0) target = $region41
    $region40: #{tpu_custom_call.1} parent=1 // pred_region
      _
    $region41: #{tpu_custom_call.1} parent=1 // pred_fallthru
      _
    // Predicated region
    $region42: #{tpu_custom_call.1} parent=1 // pred_check
      _
    $region43: #{tpu_custom_call.1} parent=1 // pred_check_branch
      %72 = sbr.rel (0) target = $region45
    $region44: #{tpu_custom_call.1} parent=1 // pred_region
      %s74 = ssub.s32 256, 256
      %75 = vsyncadd [#allocation9], %s74
      %s76 = sshll.u32 [#allocation8], 4
      %s77 = int_to_ptr.vmem [resolvable:$true] %s76
      %82 = dma.hbm_to_vmem [thread:$0]  %s10, 256, %s77, [#allocation9], 64, 64, 4
    $region45: #{tpu_custom_call.1} parent=1 // pred_fallthru
      _
    // Predicated region
    $region46: #{tpu_custom_call.1} parent=1 // pred_check
      _
    $region47: #{tpu_custom_call.1} parent=1 // pred_check_branch
      %84 = sbr.rel (0) target = $region49
    $region48: #{tpu_custom_call.1} parent=1 // pred_region
      _
    $region49: #{tpu_custom_call.1} parent=1 // pred_fallthru
      _
    // Predicated region
    $region50: #{tpu_custom_call.1} parent=1 // pred_check
      _
    $region51: #{tpu_custom_call.1} parent=1 // pred_check_branch
      %86 = sbr.rel (0) target = $region53
    $region52: #{tpu_custom_call.1} parent=1 // pred_region
      %87 = dma.done [#allocation3], 32
    $region53: #{tpu_custom_call.1} parent=1 // pred_fallthru
      _
    // Predicated region
    $region54: #{tpu_custom_call.1} parent=1 // pred_check
      _
    $region55: #{tpu_custom_call.1} parent=1 // pred_check_branch
      %89 = sbr.rel (0) target = $region57
    $region56: #{tpu_custom_call.1} parent=1 // pred_region
      %90 = dma.done [#allocation6], 16
    $region57: #{tpu_custom_call.1} parent=1 // pred_fallthru
      _
    // Predicated region
    $region58: #{tpu_custom_call.1} parent=1 // pred_check
      _
    $region59: #{tpu_custom_call.1} parent=1 // pred_check_branch
      %92 = sbr.rel (0) target = $region61
    $region60: #{tpu_custom_call.1} parent=1 // pred_region
      %93 = dma.done [#allocation6], 16
    $region61: #{tpu_custom_call.1} parent=1 // pred_fallthru
      _
    // Predicated region
    $region62: #{tpu_custom_call.1} parent=1 // pred_check
      _
    $region63: #{tpu_custom_call.1} parent=1 // pred_check_branch
      %95 = sbr.rel (0) target = $region65
    $region64: #{tpu_custom_call.1} parent=1 // pred_region
      %96 = dma.done [#allocation9], 256
    $region65: #{tpu_custom_call.1} parent=1 // pred_fallthru
      _
    %v98 = vld [vmem:[%s0] sm:$0xf]
    %v99 = vld [vmem:[%s0 + $0x4] sm:$0xf]
    %v100 = vld [vmem:[%s0 + $0x8] sm:$0xf]
    %v101 = vld [vmem:[%s0 + $0xc] sm:$0xf]
    %v102 = vld [vmem:[%s5] sm:$0xf]
    %v103 = vld [vmem:[%s5 + $0x4] sm:$0xf]
    %v104 = vld [vmem:[%s5 + $0x8] sm:$0xf]
    %v105 = vld [vmem:[%s5 + $0xc] sm:$0xf]
    %v106 = vld [vmem:[#allocation5] sm:$0x1]
    %v108 = vlaneseq
    %v109 = vshrl.u32 %v108, 7
    %v110 = vsub.s32 0, %v109
    %v111 = vrot.slane %v106, %v110
    %v117 = vunpack.c.l.b16 %v98
    %v118 = vunpack.c.l.b16 %v99
    %v119 = vunpack.c.l.b16 %v100
    %v120 = vunpack.c.l.b16 %v101
    %v121 = vpack.c.b16 %v118, %v117
    %v122 = vpack.c.b16 %v120, %v119
    %v127 = vunpack.c.l.b16 %v102
    %v128 = vunpack.c.l.b16 %v103
    %v129 = vunpack.c.l.b16 %v104
    %v130 = vunpack.c.l.b16 %v105
    %v131 = vpack.c.b16 %v128, %v127
    %v132 = vpack.c.b16 %v130, %v129
    %vm135 = vcmask 261120
    %v137 = vsel %vm135, %v121, 0
    %v140 = vsel %vm135, %v122, 0
    %142 = vmatprep.subr.bf16.mxu0 0
    %143 = vmatpush1.bf16.msra.mxu0 0
    %144 = vmatprep.subr.bf16.mxu0 0
    %145 = vmatpush1.bf16.msra.mxu0 0
    %146 = vmatprep.subr.bf16.mxu0 0
    %147 = vmatpush1.bf16.msra.mxu0 0
    %148 = vmatprep.subr.bf16.mxu0 0
    %149 = vmatpush1.bf16.msra.mxu0 0
    %150 = vmatprep.subr.bf16.mxu0 0
    %151 = vmatpush1.bf16.msra.mxu0 0
    %152 = vmatprep.subr.bf16.mxu0 0
    %153 = vmatpush1.bf16.msra.mxu0 0
    %154 = vmatprep.subr.bf16.mxu0 0
    %155 = vmatpush1.bf16.msra.mxu0 %v132
    %156 = vmatprep.subr.bf16.mxu0 0
    %157 = vmatpush1.bf16.msra.mxu0 %v131
    %158 = vmatprep.subr.bf16.mxu0 0
    %159 = vmatpush2.bf16.msra.mxu0 0
    %160 = vmatprep.subr.bf16.mxu0 0
    %161 = vmatpush2.bf16.msra.mxu0 0
    %162 = vmatprep.subr.bf16.mxu0 0
    %163 = vmatpush2.bf16.msra.mxu0 0
    %164 = vmatprep.subr.bf16.mxu0 0
    %165 = vmatpush2.bf16.msra.mxu0 0
    %166 = vmatprep.subr.bf16.mxu0 0
    %167 = vmatpush2.bf16.msra.mxu0 0
    %168 = vmatprep.subr.bf16.mxu0 0
    %169 = vmatpush2.bf16.msra.mxu0 0
    %170 = vmatprep.subr.bf16.mxu0 0
    %171 = vmatpush2.bf16.msra.mxu0 0
    %172 = vmatprep.subr.bf16.mxu0 0
    %173 = vmatpush2.bf16.msra.mxu0 0
    %174 = vmatprep.mubr.bf16.mxu0 0
    %175 = vmatmul.mubr.bf16.gmra.mxu0 %v137
    %v176 = vpop.f32.mrf.mxu0
    %v177 = vadd.f32 %v111, %v176
    %v178 = vpop.f32.mrf.mxu0
    %v179 = vpop.f32.mrf.mxu0
    %v180 = vadd.f32 %v111, %v179
    %v181 = vpop.f32.mrf.mxu0
    %182 = vmatprep.mubr.bf16.mxu0 0
    %183 = vmatmul.mubr.bf16.gmra.mxu0 %v140
    %v184 = vpop.f32.mrf.mxu0
    %v185 = vadd.f32 %v111, %v184
    %v186 = vpop.f32.mrf.mxu0
    %v187 = vpop.f32.mrf.mxu0
    %v188 = vadd.f32 %v111, %v187
    %v189 = vpop.f32.mrf.mxu0
    %190 = vdwg.mxu0
    %v191 = vtanh.pop %v177
    %v192 = vtanh.pop %v180
    %v193 = vtanh.pop %v185
    %v194 = vtanh.pop %v188
    %v195 = vld [vmem:[%s1] sm:$0xf]
    %v196 = vld [vmem:[%s1 + $0x4] sm:$0xf]
    %v197 = vld [vmem:[%s1 + $0x8] sm:$0xf]
    %v198 = vld [vmem:[%s1 + $0xc] sm:$0xf]
    %v199 = vld [vmem:[%s7] sm:$0xf]
    %v200 = vld [vmem:[%s7 + $0x4] sm:$0xf]
    %v201 = vld [vmem:[%s7 + $0x8] sm:$0xf]
    %v202 = vld [vmem:[%s7 + $0xc] sm:$0xf]
    %v203 = vld [vmem:[#allocation7] sm:$0x1]
    %v205 = vlaneseq
    %v206 = vshrl.u32 %v205, 7
    %v207 = vsub.s32 0, %v206
    %v208 = vrot.slane %v203, %v207
    %v214 = vunpack.c.l.b16 %v195
    %v215 = vunpack.c.l.b16 %v196
    %v216 = vunpack.c.l.b16 %v197
    %v217 = vunpack.c.l.b16 %v198
    %v218 = vpack.c.b16 %v215, %v214
    %v219 = vpack.c.b16 %v217, %v216
    %v224 = vunpack.c.l.b16 %v199
    %v225 = vunpack.c.l.b16 %v200
    %v226 = vunpack.c.l.b16 %v201
    %v227 = vunpack.c.l.b16 %v202
    %v228 = vpack.c.b16 %v225, %v224
    %v229 = vpack.c.b16 %v227, %v226
    %v233 = vsel %vm135, %v218, 0
    %v236 = vsel %vm135, %v219, 0
    %238 = vmatprep.subr.bf16.mxu0 0
    %239 = vmatpush1.bf16.msra.mxu0 0
    %240 = vmatprep.subr.bf16.mxu0 0
    %241 = vmatpush1.bf16.msra.mxu0 0
    %242 = vmatprep.subr.bf16.mxu0 0
    %243 = vmatpush1.bf16.msra.mxu0 0
    %244 = vmatprep.subr.bf16.mxu0 0
    %245 = vmatpush1.bf16.msra.mxu0 0
    %246 = vmatprep.subr.bf16.mxu0 0
    %247 = vmatpush1.bf16.msra.mxu0 0
    %248 = vmatprep.subr.bf16.mxu0 0
    %249 = vmatpush1.bf16.msra.mxu0 0
    %250 = vmatprep.subr.bf16.mxu0 0
    %251 = vmatpush1.bf16.msra.mxu0 %v229
    %252 = vmatprep.subr.bf16.mxu0 0
    %253 = vmatpush1.bf16.msra.mxu0 %v228
    %254 = vmatprep.subr.bf16.mxu0 0
    %255 = vmatpush2.bf16.msra.mxu0 0
    %256 = vmatprep.subr.bf16.mxu0 0
    %257 = vmatpush2.bf16.msra.mxu0 0
    %258 = vmatprep.subr.bf16.mxu0 0
    %259 = vmatpush2.bf16.msra.mxu0 0
    %260 = vmatprep.subr.bf16.mxu0 0
    %261 = vmatpush2.bf16.msra.mxu0 0
    %262 = vmatprep.subr.bf16.mxu0 0
    %263 = vmatpush2.bf16.msra.mxu0 0
    %264 = vmatprep.subr.bf16.mxu0 0
    %265 = vmatpush2.bf16.msra.mxu0 0
    %266 = vmatprep.subr.bf16.mxu0 0
    %267 = vmatpush2.bf16.msra.mxu0 0
    %268 = vmatprep.subr.bf16.mxu0 0
    %269 = vmatpush2.bf16.msra.mxu0 0
    %270 = vmatprep.mubr.bf16.mxu0 0
    %271 = vmatmul.mubr.bf16.gmra.mxu0 %v233
    %v272 = vpop.f32.mrf.mxu0
    %v273 = vadd.f32 %v208, %v272
    %v274 = vpop.f32.mrf.mxu0
    %v275 = vpop.f32.mrf.mxu0
    %v276 = vadd.f32 %v208, %v275
    %v277 = vpop.f32.mrf.mxu0
    %278 = vmatprep.mubr.bf16.mxu0 0
    %279 = vmatmul.mubr.bf16.gmra.mxu0 %v236
    %v280 = vpop.f32.mrf.mxu0
    %v281 = vadd.f32 %v208, %v280
    %v282 = vpop.f32.mrf.mxu0
    %v283 = vpop.f32.mrf.mxu0
    %v284 = vadd.f32 %v208, %v283
    %v285 = vpop.f32.mrf.mxu0
    %286 = vdwg.mxu0
    %v287 = vtanh.pop %v273
    %v288 = vtanh.pop %v276
    %v289 = vtanh.pop %v281
    %v290 = vtanh.pop %v284
    %v291 = vpack.c.bf16 %v288, %v287
    %v292 = vpack.c.bf16 %v290, %v289
    %v293 = vld [vmem:[#allocation8] sm:$0xf]
    %v294 = vld [vmem:[#allocation8 + $0x4] sm:$0xf]
    %v295 = vld [vmem:[#allocation8 + $0x8] sm:$0xf]
    %v296 = vld [vmem:[#allocation8 + $0xc] sm:$0xf]
    %v297 = vld [vmem:[%s11] sm:$0x1]
    %v299 = vlaneseq
    %v300 = vshrl.u32 %v299, 7
    %v301 = vsub.s32 0, %v300
    %v302 = vrot.slane %v297, %v301
    %v308 = vunpack.c.l.b16 %v293
    %v309 = vunpack.c.l.b16 %v294
    %v310 = vunpack.c.l.b16 %v295
    %v311 = vunpack.c.l.b16 %v296
    %v312 = vpack.c.b16 %v309, %v308
    %v313 = vpack.c.b16 %v311, %v310
    %v317 = vsel %vm135, %v291, 0
    %v320 = vsel %vm135, %v292, 0
    %322 = vmatprep.subr.bf16.mxu0 0
    %323 = vmatpush1.bf16.msra.mxu0 0
    %324 = vmatprep.subr.bf16.mxu0 0
    %325 = vmatpush1.bf16.msra.mxu0 0
    %326 = vmatprep.subr.bf16.mxu0 0
    %327 = vmatpush1.bf16.msra.mxu0 0
    %328 = vmatprep.subr.bf16.mxu0 0
    %329 = vmatpush1.bf16.msra.mxu0 0
    %330 = vmatprep.subr.bf16.mxu0 0
    %331 = vmatpush1.bf16.msra.mxu0 0
    %332 = vmatprep.subr.bf16.mxu0 0
    %333 = vmatpush1.bf16.msra.mxu0 0
    %334 = vmatprep.subr.bf16.mxu0 0
    %335 = vmatpush1.bf16.msra.mxu0 %v313
    %336 = vmatprep.subr.bf16.mxu0 0
    %337 = vmatpush1.bf16.msra.mxu0 %v312
    %338 = vmatprep.subr.bf16.mxu0 0
    %339 = vmatpush2.bf16.msra.mxu0 0
    %340 = vmatprep.subr.bf16.mxu0 0
    %341 = vmatpush2.bf16.msra.mxu0 0
    %342 = vmatprep.subr.bf16.mxu0 0
    %343 = vmatpush2.bf16.msra.mxu0 0
    %344 = vmatprep.subr.bf16.mxu0 0
    %345 = vmatpush2.bf16.msra.mxu0 0
    %346 = vmatprep.subr.bf16.mxu0 0
    %347 = vmatpush2.bf16.msra.mxu0 0
    %348 = vmatprep.subr.bf16.mxu0 0
    %349 = vmatpush2.bf16.msra.mxu0 0
    %350 = vmatprep.subr.bf16.mxu0 0
    %351 = vmatpush2.bf16.msra.mxu0 0
    %352 = vmatprep.subr.bf16.mxu0 0
    %353 = vmatpush2.bf16.msra.mxu0 0
    %354 = vmatprep.mubr.bf16.mxu0 0
    %355 = vmatmul.mubr.bf16.gmra.mxu0 %v317
    %v356 = vpop.f32.mrf.mxu0
    %v357 = vadd.f32 %v302, %v356
    %v358 = vpop.f32.mrf.mxu0
    %v359 = vpop.f32.mrf.mxu0
    %v360 = vadd.f32 %v302, %v359
    %v361 = vpop.f32.mrf.mxu0
    %362 = vmatprep.mubr.bf16.mxu0 0
    %363 = vmatmul.mubr.bf16.gmra.mxu0 %v320
    %v364 = vpop.f32.mrf.mxu0
    %v365 = vadd.f32 %v302, %v364
    %v366 = vpop.f32.mrf.mxu0
    %v367 = vpop.f32.mrf.mxu0
    %v368 = vadd.f32 %v302, %v367
    %v369 = vpop.f32.mrf.mxu0
    %370 = vdwg.mxu0
    %v371 = vld [vmem:[%s9] sm:$0xf]
    %v372 = vld [vmem:[%s9 + $0x4] sm:$0xf]
    %v373 = vld [vmem:[%s9 + $0x8] sm:$0xf]
    %v374 = vld [vmem:[%s9 + $0xc] sm:$0xf]
    %v379 = vunpack.c.l.b16 %v371
    %v380 = vunpack.c.l.b16 %v372
    %v381 = vunpack.c.l.b16 %v373
    %v382 = vunpack.c.l.b16 %v374
    %v383 = vpack.c.b16 %v380, %v379
    %v384 = vpack.c.b16 %v382, %v381
    %387 = vmatprep.subr.bf16.mxu0 0
    %388 = vmatpush1.bf16.msra.mxu0 0
    %389 = vmatprep.subr.bf16.mxu0 0
    %390 = vmatpush1.bf16.msra.mxu0 0
    %391 = vmatprep.subr.bf16.mxu0 0
    %392 = vmatpush1.bf16.msra.mxu0 0
    %393 = vmatprep.subr.bf16.mxu0 0
    %394 = vmatpush1.bf16.msra.mxu0 0
    %395 = vmatprep.subr.bf16.mxu0 0
    %396 = vmatpush1.bf16.msra.mxu0 0
    %397 = vmatprep.subr.bf16.mxu0 0
    %398 = vmatpush1.bf16.msra.mxu0 0
    %399 = vmatprep.subr.bf16.mxu0 0
    %400 = vmatpush1.bf16.msra.mxu0 %v384
    %401 = vmatprep.subr.bf16.mxu0 0
    %402 = vmatpush1.bf16.msra.mxu0 %v383
    %403 = vmatprep.subr.bf16.mxu0 0
    %404 = vmatpush2.bf16.msra.mxu0 0
    %405 = vmatprep.subr.bf16.mxu0 0
    %406 = vmatpush2.bf16.msra.mxu0 0
    %407 = vmatprep.subr.bf16.mxu0 0
    %408 = vmatpush2.bf16.msra.mxu0 0
    %409 = vmatprep.subr.bf16.mxu0 0
    %410 = vmatpush2.bf16.msra.mxu0 0
    %411 = vmatprep.subr.bf16.mxu0 0
    %412 = vmatpush2.bf16.msra.mxu0 0
    %413 = vmatprep.subr.bf16.mxu0 0
    %414 = vmatpush2.bf16.msra.mxu0 0
    %415 = vmatprep.subr.bf16.mxu0 0
    %416 = vmatpush2.bf16.msra.mxu0 0
    %417 = vmatprep.subr.bf16.mxu0 0
    %418 = vmatpush2.bf16.msra.mxu0 0
    %419 = vmatprep.mubr.bf16.mxu0 0
    %420 = vmatmul.mubr.bf16.gmra.mxu0 %v317
    %v421 = vpop.f32.mrf.mxu0
    %v422 = vadd.f32 0.0, %v421
    %v423 = vpop.f32.mrf.mxu0
    %v424 = vpop.f32.mrf.mxu0
    %v425 = vadd.f32 0.0, %v424
    %v426 = vpop.f32.mrf.mxu0
    %427 = vmatprep.mubr.bf16.mxu0 0
    %428 = vmatmul.mubr.bf16.gmra.mxu0 %v320
    %v429 = vpop.f32.mrf.mxu0
    %v430 = vadd.f32 0.0, %v429
    %v431 = vpop.f32.mrf.mxu0
    %v432 = vpop.f32.mrf.mxu0
    %v433 = vadd.f32 0.0, %v432
    %v434 = vpop.f32.mrf.mxu0
    %435 = vdwg.mxu0
    %v436 = vpack.c.bf16 %v425, %v422
    %v437 = vpack.c.bf16 %v433, %v430
    %v438 = vpack.c.bf16 %v192, %v191
    %v439 = vpack.c.bf16 %v194, %v193
    %v441 = vsel %vm135, %v436, 0
    %v444 = vsel %vm135, %v438, 0
    %446 = vmatprep.subr.bf16.mxu0 0
    %447 = vmatpush1.bf16.xpose.msra.mxu0 0
    %448 = vmatprep.subr.bf16.mxu0 0
    %449 = vmatpush1.bf16.xpose.msra.mxu0 0
    %450 = vmatprep.subr.bf16.mxu0 0
    %451 = vmatpush1.bf16.xpose.msra.mxu0 0
    %452 = vmatprep.subr.bf16.mxu0 0
    %453 = vmatpush1.bf16.xpose.msra.mxu0 0
    %454 = vmatprep.subr.bf16.mxu0 0
    %455 = vmatpush1.bf16.xpose.msra.mxu0 0
    %456 = vmatprep.subr.bf16.mxu0 0
    %457 = vmatpush1.bf16.xpose.msra.mxu0 0
    %458 = vmatprep.subr.bf16.mxu0 0
    %459 = vmatpush1.bf16.xpose.msra.mxu0 0
    %460 = vmatprep.subr.bf16.mxu0 0
    %461 = vmatpush1.bf16.xpose.msra.mxu0 %v444
    %462 = vmatprep.subr.bf16.mxu0 0
    %463 = vmatpush2.bf16.xpose.msra.mxu0 0
    %464 = vmatprep.subr.bf16.mxu0 0
    %465 = vmatpush2.bf16.xpose.msra.mxu0 0
    %466 = vmatprep.subr.bf16.mxu0 0
    %467 = vmatpush2.bf16.xpose.msra.mxu0 0
    %468 = vmatprep.subr.bf16.mxu0 0
    %469 = vmatpush2.bf16.xpose.msra.mxu0 0
    %470 = vmatprep.subr.bf16.mxu0 0
    %471 = vmatpush2.bf16.xpose.msra.mxu0 0
    %472 = vmatprep.subr.bf16.mxu0 0
    %473 = vmatpush2.bf16.xpose.msra.mxu0 0
    %474 = vmatprep.subr.bf16.mxu0 0
    %475 = vmatpush2.bf16.xpose.msra.mxu0 0
    %476 = vmatprep.subr.bf16.mxu0 0
    %477 = vmatpush2.bf16.xpose.msra.mxu0 0
    %478 = vmatprep.mubr.bf16.mxu0 0
    %479 = vmatmul.mubr.bf16.gmra.mxu0 %v441
    %v480 = vpop.f32.mrf.mxu0
    %v481 = vadd.f32 0.0, %v480
    %v482 = vpop.f32.mrf.mxu0
    %v483 = vpop.f32.mrf.mxu0
    %v484 = vadd.f32 0.0, %v483
    %v485 = vpop.f32.mrf.mxu0
    %486 = vdwg.mxu0
    %v488 = vsel %vm135, %v437, 0
    %v491 = vsel %vm135, %v439, 0
    %493 = vmatprep.subr.bf16.mxu0 0
    %494 = vmatpush1.bf16.xpose.msra.mxu0 0
    %495 = vmatprep.subr.bf16.mxu0 0
    %496 = vmatpush1.bf16.xpose.msra.mxu0 0
    %497 = vmatprep.subr.bf16.mxu0 0
    %498 = vmatpush1.bf16.xpose.msra.mxu0 0
    %499 = vmatprep.subr.bf16.mxu0 0
    %500 = vmatpush1.bf16.xpose.msra.mxu0 0
    %501 = vmatprep.subr.bf16.mxu0 0
    %502 = vmatpush1.bf16.xpose.msra.mxu0 0
    %503 = vmatprep.subr.bf16.mxu0 0
    %504 = vmatpush1.bf16.xpose.msra.mxu0 0
    %505 = vmatprep.subr.bf16.mxu0 0
    %506 = vmatpush1.bf16.xpose.msra.mxu0 0
    %507 = vmatprep.subr.bf16.mxu0 0
    %508 = vmatpush1.bf16.xpose.msra.mxu0 %v491
    %509 = vmatprep.subr.bf16.mxu0 0
    %510 = vmatpush2.bf16.xpose.msra.mxu0 0
    %511 = vmatprep.subr.bf16.mxu0 0
    %512 = vmatpush2.bf16.xpose.msra.mxu0 0
    %513 = vmatprep.subr.bf16.mxu0 0
    %514 = vmatpush2.bf16.xpose.msra.mxu0 0
    %515 = vmatprep.subr.bf16.mxu0 0
    %516 = vmatpush2.bf16.xpose.msra.mxu0 0
    %517 = vmatprep.subr.bf16.mxu0 0
    %518 = vmatpush2.bf16.xpose.msra.mxu0 0
    %519 = vmatprep.subr.bf16.mxu0 0
    %520 = vmatpush2.bf16.xpose.msra.mxu0 0
    %521 = vmatprep.subr.bf16.mxu0 0
    %522 = vmatpush2.bf16.xpose.msra.mxu0 0
    %523 = vmatprep.subr.bf16.mxu0 0
    %524 = vmatpush2.bf16.xpose.msra.mxu0 0
    %525 = vmatprep.mubr.bf16.mxu0 0
    %526 = vmatmul.mubr.bf16.gmra.mxu0 %v488
    %v527 = vpop.f32.mrf.mxu0
    %v528 = vadd.f32 0.0, %v527
    %v529 = vpop.f32.mrf.mxu0
    %v530 = vpop.f32.mrf.mxu0
    %v531 = vadd.f32 0.0, %v530
    %v532 = vpop.f32.mrf.mxu0
    %533 = vdwg.mxu0
    %v534 = vld [vmem:[#allocation2] sm:$0x1]
    %v535 = vld [vmem:[#allocation2 + $0x1] sm:$0x1]
    %vm536 = vcmp.gt.f32.partialorder %v534, 0.0
    %vm537 = vcmp.gt.f32.partialorder %v535, 0.0
    %v538 = vsel %vm536, 1, 0
    %v539 = vsel %vm537, 1, 0
    %v540 = vlaneseq
    %v541 = vshrl.u32 %v540, 7
    %v542 = vsub.s32 0, %v541
    %v543 = vrot.slane %v538, %v542
    %v544 = vlaneseq
    %v545 = vshrl.u32 %v544, 7
    %v546 = vsub.s32 0, %v545
    %v547 = vrot.slane %v539, %v546
    %vm548 = vcmp.eq.s32.totalorder %v543, 1
    %vm549 = vcmp.eq.s32.totalorder %v547, 1
    %v550 = vsel %vm548, %v481, -1e+09
    %v551 = vsel %vm548, %v484, -1e+09
    %v552 = vsel %vm549, %v528, -1e+09
    %v553 = vsel %vm549, %v531, -1e+09
    %554 = vst [vmem:[#allocation10] sm:$0xff] %v357
    %555 = vst [vmem:[#allocation10 + $0x10] sm:$0xff] %v360
    %556 = vst [vmem:[#allocation10 + $0x20] sm:$0xff] %v365
    %557 = vst [vmem:[#allocation10 + $0x30] sm:$0xff] %v368
    %vm558 = vcmask 130048
    %v559 = vsel %vm558, %v550, -1e+09
    %v560 = vsel %vm558, %v551, -1e+09
    %v561 = vsel %vm558, %v552, -1e+09
    %v562 = vsel %vm558, %v553, -1e+09
    %563 = vst [vmem:[#allocation10 + $0x8] sm:$0xff] %v559
    %564 = vst [vmem:[#allocation10 + $0x18] sm:$0xff] %v560
    %565 = vst [vmem:[#allocation10 + $0x28] sm:$0xff] %v561
    %566 = vst [vmem:[#allocation10 + $0x38] sm:$0xff] %v562
    %567 = vmax.xlane.f32.xlu0 %v357
    %v568 = vpop.xlane.xlu0 %567
    %569 = vmax.xlane.f32.xlu0 %v360
    %v570 = vpop.xlane.xlu0 %569
    %571 = vmax.xlane.f32.xlu0 %v365
    %v572 = vpop.xlane.xlu0 %571
    %573 = vmax.xlane.f32.xlu0 %v368
    %v574 = vpop.xlane.xlu0 %573
    %v575 = vsel %vm558, %v550, -inf
    %576 = vmax.xlane.f32.xlu0 %v575
    %v577 = vpop.xlane.xlu0 %576
    %v578 = vsel %vm558, %v551, -inf
    %579 = vmax.xlane.f32.xlu0 %v578
    %v580 = vpop.xlane.xlu0 %579
    %v581 = vsel %vm558, %v552, -inf
    %582 = vmax.xlane.f32.xlu0 %v581
    %v583 = vpop.xlane.xlu0 %582
    %v584 = vsel %vm558, %v553, -inf
    %585 = vmax.xlane.f32.xlu0 %v584
    %v586 = vpop.xlane.xlu0 %585
    %v587 = vmax.f32 %v568, %v577
    %v588 = vmax.f32 %v570, %v580
    %v589 = vmax.f32 %v572, %v583
    %v590 = vmax.f32 %v574, %v586
    %v591 = vsub.f32 %v357, %v587
    %v592 = vsub.f32 %v360, %v588
    %v593 = vsub.f32 %v365, %v589
    %v594 = vsub.f32 %v368, %v590
    %v595 = vmul.f32 %v591, 1.442695
    %v596 = vpow.pop %v595
    %v597 = vmul.f32 %v592, 1.442695
    %v598 = vpow.pop %v597
    %v599 = vmul.f32 %v593, 1.442695
    %v600 = vpow.pop %v599
    %v601 = vmul.f32 %v594, 1.442695
    %v602 = vpow.pop %v601
    %603 = vadd.xlane.f32.xlu0 %v596
    %v604 = vpop.xlane.xlu0 %603
    %605 = vadd.xlane.f32.xlu0 %v598
    %v606 = vpop.xlane.xlu0 %605
    %607 = vadd.xlane.f32.xlu0 %v600
    %v608 = vpop.xlane.xlu0 %607
    %609 = vadd.xlane.f32.xlu0 %v602
    %v610 = vpop.xlane.xlu0 %609
    %v611 = vsub.f32 %v550, %v587
    %v612 = vsub.f32 %v551, %v588
    %v613 = vsub.f32 %v552, %v589
    %v614 = vsub.f32 %v553, %v590
    %v615 = vmul.f32 %v611, 1.442695
    %v616 = vpow.pop %v615
    %v617 = vmul.f32 %v612, 1.442695
    %v618 = vpow.pop %v617
    %v619 = vmul.f32 %v613, 1.442695
    %v620 = vpow.pop %v619
    %v621 = vmul.f32 %v614, 1.442695
    %v622 = vpow.pop %v621
    %v623 = vsel %vm558, %v616, 0.0
    %624 = vadd.xlane.f32.xlu0 %v623
    %v625 = vpop.xlane.xlu0 %624
    %v626 = vsel %vm558, %v618, 0.0
    %627 = vadd.xlane.f32.xlu0 %v626
    %v628 = vpop.xlane.xlu0 %627
    %v629 = vsel %vm558, %v620, 0.0
    %630 = vadd.xlane.f32.xlu0 %v629
    %v631 = vpop.xlane.xlu0 %630
    %v632 = vsel %vm558, %v622, 0.0
    %633 = vadd.xlane.f32.xlu0 %v632
    %v634 = vpop.xlane.xlu0 %633
    %v635 = vadd.f32 %v604, %v625
    %v636 = vadd.f32 %v606, %v628
    %v637 = vadd.f32 %v608, %v631
    %v638 = vadd.f32 %v610, %v634
    %v639 = vlog2.pop %v635
    %v640 = vmul.f32 %v639, 0.6931472
    %v641 = vlog2.pop %v636
    %v642 = vmul.f32 %v641, 0.6931472
    %v643 = vlog2.pop %v637
    %v644 = vmul.f32 %v643, 0.6931472
    %v645 = vlog2.pop %v638
    %v646 = vmul.f32 %v645, 0.6931472
    %v647 = vadd.f32 %v587, %v640
    %v648 = vadd.f32 %v588, %v642
    %v649 = vadd.f32 %v589, %v644
    %v650 = vadd.f32 %v590, %v646
    %v651 = vld [vmem:[%s3] sm:$0xff]
    %v652 = vld [vmem:[%s3 + $0x8] sm:$0xff]
    %v653 = vld [vmem:[%s3 + $0x10] sm:$0xff]
    %v654 = vld [vmem:[%s3 + $0x18] sm:$0xff]
    %v655 = vlaneseq
    %v656 = vand.u32 %v655, 127
    %v657 = vadd.s32 %v656, 128
    %658 = vset.pattern.permute.xlu0 0
    %659 = vperm.xlu0 %658, %v651
    %v660 = vpop.permute.xlu0 %659
    %661 = vset.pattern.permute.xlu0 0
    %662 = vperm.xlu0 %661, %v652
    %v663 = vpop.permute.xlu0 %662
    %664 = vset.pattern.permute.xlu0 0
    %665 = vperm.xlu0 %664, %v653
    %v666 = vpop.permute.xlu0 %665
    %667 = vset.pattern.permute.xlu0 0
    %668 = vperm.xlu0 %667, %v654
    %v669 = vpop.permute.xlu0 %668
    %vm670 = vcmp.eq.s32.totalorder %v656, %v660
    %vm671 = vcmp.eq.s32.totalorder %v656, %v663
    %vm672 = vcmp.eq.s32.totalorder %v656, %v666
    %vm673 = vcmp.eq.s32.totalorder %v656, %v669
    %v674 = vsel %vm670, %v357, 0.0
    %v675 = vsel %vm671, %v360, 0.0
    %v676 = vsel %vm672, %v365, 0.0
    %v677 = vsel %vm673, %v368, 0.0
    %678 = vadd.xlane.f32.xlu0 %v674
    %v679 = vpop.xlane.xlu0 %678
    %680 = vadd.xlane.f32.xlu0 %v675
    %v681 = vpop.xlane.xlu0 %680
    %682 = vadd.xlane.f32.xlu0 %v676
    %v683 = vpop.xlane.xlu0 %682
    %684 = vadd.xlane.f32.xlu0 %v677
    %v685 = vpop.xlane.xlu0 %684
    %vm686 = vcmp.eq.s32.totalorder %v657, %v660
    %vm687 = vcmp.eq.s32.totalorder %v657, %v663
    %vm688 = vcmp.eq.s32.totalorder %v657, %v666
    %vm689 = vcmp.eq.s32.totalorder %v657, %v669
    %v690 = vsel %vm686, %v550, 0.0
    %v691 = vsel %vm687, %v551, 0.0
    %v692 = vsel %vm688, %v552, 0.0
    %v693 = vsel %vm689, %v553, 0.0
    %v694 = vsel %vm558, %v690, 0.0
    %695 = vadd.xlane.f32.xlu0 %v694
    %v696 = vpop.xlane.xlu0 %695
    %v697 = vsel %vm558, %v691, 0.0
    %698 = vadd.xlane.f32.xlu0 %v697
    %v699 = vpop.xlane.xlu0 %698
    %v700 = vsel %vm558, %v692, 0.0
    %701 = vadd.xlane.f32.xlu0 %v700
    %v702 = vpop.xlane.xlu0 %701
    %v703 = vsel %vm558, %v693, 0.0
    %704 = vadd.xlane.f32.xlu0 %v703
    %v705 = vpop.xlane.xlu0 %704
    %v706 = vadd.f32 %v679, %v696
    %v707 = vadd.f32 %v681, %v699
    %v708 = vadd.f32 %v683, %v702
    %v709 = vadd.f32 %v685, %v705
    %v710 = vsub.f32 %v647, %v706
    %v711 = vsub.f32 %v648, %v707
    %v712 = vsub.f32 %v649, %v708
    %v713 = vsub.f32 %v650, %v709
    %v714 = vld [vmem:[%s4] sm:$0xff]
    %v715 = vld [vmem:[%s4 + $0x8] sm:$0xff]
    %v716 = vld [vmem:[%s4 + $0x10] sm:$0xff]
    %v717 = vld [vmem:[%s4 + $0x18] sm:$0xff]
    %v718 = vmul.f32 %v710, %v714
    %v719 = vmul.f32 %v711, %v715
    %v720 = vmul.f32 %v712, %v716
    %v721 = vmul.f32 %v713, %v717
    %vm722 = vcmask 7168
    %v723 = vsel %vm722, %v718, 0.0
    %v724 = vsel %vm722, %v719, 0.0
    %v725 = vadd.f32 %v723, %v724
    %v726 = vsel %vm722, %v720, 0.0
    %v727 = vadd.f32 %v725, %v726
    %v728 = vsel %vm722, %v721, 0.0
    %v729 = vadd.f32 %v727, %v728
    %730 = vadd.xlane.f32.xlu0 %v729
    %v731 = vpop.xlane.xlu0 %730
    %v732 = vrot.slane %v731, 4
    %v733 = vadd.f32 %v731, %v732
    %v734 = vrot.slane %v733, 2
    %v735 = vadd.f32 %v733, %v734
    %v736 = vrot.slane %v735, 1
    %v737 = vadd.f32 %v735, %v736
    %s738 = vtos %v737
    %v739 = vstv %s738
    %vm740 = vcmask 0
    %741 = vst.msk [vmem:[#allocation11] sm:$0x1] %vm740, %v739
    %v742 = vsel %vm722, %v714, 0.0
    %v743 = vsel %vm722, %v715, 0.0
    %v744 = vadd.f32 %v742, %v743
    %v745 = vsel %vm722, %v716, 0.0
    %v746 = vadd.f32 %v744, %v745
    %v747 = vsel %vm722, %v717, 0.0
    %v748 = vadd.f32 %v746, %v747
    %749 = vadd.xlane.f32.xlu0 %v748
    %v750 = vpop.xlane.xlu0 %749
    %v751 = vrot.slane %v750, 4
    %v752 = vadd.f32 %v750, %v751
    %v753 = vrot.slane %v752, 2
    %v754 = vadd.f32 %v752, %v753
    %v755 = vrot.slane %v754, 1
    %v756 = vadd.f32 %v754, %v755
    %s757 = vtos %v756
    %v758 = vstv %s757
    %759 = vst.msk [vmem:[#allocation13] sm:$0x1] %vm740, %v758
    // Predicated region
    $region66: #{tpu_custom_call.1} parent=1 // pred_check
      _
    $region67: #{tpu_custom_call.1} parent=1 // pred_check_branch
      %761 = sbr.rel (0) target = $region69
    $region68: #{tpu_custom_call.1} parent=1 // pred_region
      %s763 = ssub.s32 1024, 1024
      %764 = vsyncadd [#allocation4], %s763
      %s765 = sshll.u32 [#allocation10], 4
      %s766 = int_to_ptr.vmem [resolvable:$true] %s765
      %771 = dma.vmem_to_hbm [thread:$0]  %s766, 1024, %s12, [#allocation4], 256, 256, 16
    $region69: #{tpu_custom_call.1} parent=1 // pred_fallthru
      _
    // Predicated region
    $region70: #{tpu_custom_call.1} parent=1 // pred_check
      _
    $region71: #{tpu_custom_call.1} parent=1 // pred_check_branch
      %773 = sbr.rel (0) target = $region73
    $region72: #{tpu_custom_call.1} parent=1 // pred_region
      %s775 = ssub.s32 16, 16
      %776 = vsyncadd [#allocation12], %s775
      %s778 = sshll.u32 [#allocation11], 4
      %s779 = int_to_ptr.vmem [resolvable:$true] %s778
      %781 = dma.vmem_to_hbm [thread:$0]  %s779, 16, %s13, [#allocation12]
    $region73: #{tpu_custom_call.1} parent=1 // pred_fallthru
      _
    // Predicated region
    $region74: #{tpu_custom_call.1} parent=1 // pred_check
      _
    $region75: #{tpu_custom_call.1} parent=1 // pred_check_branch
      %783 = sbr.rel (0) target = $region77
    $region76: #{tpu_custom_call.1} parent=1 // pred_region
      %s785 = ssub.s32 16, 16
      %786 = vsyncadd [#allocation12], %s785
      %s788 = sshll.u32 [#allocation13], 4
      %s789 = int_to_ptr.vmem [resolvable:$true] %s788
      %791 = dma.vmem_to_hbm [thread:$0]  %s789, 16, %s14, [#allocation12]
    $region77: #{tpu_custom_call.1} parent=1 // pred_fallthru
      _
    // Predicated region
    $region78: #{tpu_custom_call.1} parent=1 // pred_check
      _
    $region79: #{tpu_custom_call.1} parent=1 // pred_check_branch
      %793 = sbr.rel (0) target = $region81
    $region80: #{tpu_custom_call.1} parent=1 // pred_region
      %794 = dma.done [#allocation4], 1024
    $region81: #{tpu_custom_call.1} parent=1 // pred_fallthru
      _
    // Predicated region
    $region82: #{tpu_custom_call.1} parent=1 // pred_check
      _
    $region83: #{tpu_custom_call.1} parent=1 // pred_check_branch
      %796 = sbr.rel (0) target = $region85
    $region84: #{tpu_custom_call.1} parent=1 // pred_region
      %797 = dma.done [#allocation12], 16
    $region85: #{tpu_custom_call.1} parent=1 // pred_fallthru
      _
    // Predicated region
    $region86: #{tpu_custom_call.1} parent=1 // pred_check
      _
    $region87: #{tpu_custom_call.1} parent=1 // pred_check_branch
      %799 = sbr.rel (0) target = $region89
    $region88: #{tpu_custom_call.1} parent=1 // pred_region
      %800 = dma.done [#allocation12], 16
    $region89: #{tpu_custom_call.1} parent=1 // pred_fallthru
      _
    %801 = vsyncpa [#allocation3], 1
    %802 = vsyncpa [#allocation6], 1
    %803 = vsyncpa [#allocation9], 1
    %804 = vsyncpa [#allocation4], 1
    %805 = vsyncpa [#allocation12], 1

</llo_original>
